<compile_context>
chip_gen: v7x
topology: tpu7x:2x2x1
jax: 0.10.0
libtpu: 0.0.40
codegen_flags: <defaults>
</compile_context>

<pallas_src>
import functools

import jax
import jax.numpy as jnp
from jax.experimental import pallas as pl
from jax.experimental.pallas import tpu as pltpu


def _round_up(x, m):
    return ((x + m - 1) // m) * m


def _mlp_kernel(x_ref, w_ref, b_ref, o_ref, *, sphere_dim, n_hidden):
    """x_ref: (tm, sphere_dim) f32; w_ref: (5*n_hidden, in_w) bf16;
    b_ref: (n_hidden, 8) f32 (cols 0..4 = biases, col 5 = w6); o_ref: (1, tm) f32."""
    compute_dtype = w_ref.dtype            # bf16
    x = x_ref[...].astype(compute_dtype)   # in-kernel cast (no wrapper pass)

    # Layer 1: contract the feature dim of both operands (q.k^T pattern) so the
    # result is already batch-on-lanes: (n_hidden, tm).
    w1 = w_ref[0:n_hidden, 0:sphere_dim]   # static slice of the packed slab
    h = jax.lax.dot_general(w1, x, (((1,), (1,)), ((), ())),
                            preferred_element_type=jnp.float32)
    h = jnp.maximum(h + b_ref[:, 0:1], 0.0).astype(compute_dtype)

    # Layers 2..5: plain (n, n) @ (n, tm) MXU matmuls with f32 accumulation;
    # bias/ReLU in f32, then back to bf16 for the next MXU op.
    for l in range(1, 5):
        wl = w_ref[l * n_hidden:(l + 1) * n_hidden, 0:n_hidden]
        y = jnp.dot(wl, h, preferred_element_type=jnp.float32)
        h = jnp.maximum(y + b_ref[:, l:l + 1], 0.0).astype(compute_dtype)

    # Final layer (n_hidden -> 1, no bias): f32 multiply by the w6 column and a
    # sublane reduction -> lane-dense (1, tm) output block (unmasked store for
    # full tiles; biggest single lever per the layout docs, esp. on v5e).
    out = jnp.sum(h.astype(jnp.float32) * b_ref[:, 5:6], axis=0, keepdims=True)
    o_ref[...] = out.astype(o_ref.dtype)


def _choose_tile(batch, tm_max):
    """Pick the batch (lane) tile.  Small batches -> one block equal to the full
    array (no pipeline overhead); larger batches -> tiles that are multiples of
    128 (lane-dense) with at least 2 grid steps so v7x's 2 TCs both get work."""
    if batch <= 256:
        return batch, 1
    tm = min(tm_max, _round_up(pl.cdiv(batch, 2), 128))
    return tm, pl.cdiv(batch, tm)


def large_relu_forward(x, params, *, tm_max=1024):
    """x: (batch, sphere_dim) f32; params from init_params. Returns (batch, 1) f32."""
    batch, sphere_dim = x.shape
    w_slab = params["w_slab"]
    b_slab = params["b_slab"]
    n_hidden = b_slab.shape[0]

    tm, grid_m = _choose_tile(batch, tm_max)

    kernel = functools.partial(_mlp_kernel, sphere_dim=sphere_dim, n_hidden=n_hidden)

    in_specs = [
        pl.BlockSpec((tm, sphere_dim), lambda i: (i, 0)),      # x: tiled over batch
        pl.BlockSpec(w_slab.shape, lambda i: (0, 0)),          # resident weight slab
        pl.BlockSpec(b_slab.shape, lambda i: (0, 0)),          # resident bias/w6 slab
    ]
    out_spec = pl.BlockSpec((1, tm), lambda i: (0, i))         # lane-dense output slab

    flops = 2 * batch * n_hidden * (sphere_dim + 4 * n_hidden + 1)
    bytes_accessed = (int(x.size) * x.dtype.itemsize
                      + int(w_slab.size) * w_slab.dtype.itemsize
                      + int(b_slab.size) * b_slab.dtype.itemsize
                      + batch * 4)

    out = pl.pallas_call(
        kernel,
        out_shape=jax.ShapeDtypeStruct((1, batch), jnp.float32),
        grid_spec=pl.GridSpec(grid=(grid_m,), in_specs=in_specs, out_specs=out_spec),
        compiler_params=pltpu.CompilerParams(dimension_semantics=("parallel",)),
        cost_estimate=pl.CostEstimate(flops=int(flops), transcendentals=0,
                                      bytes_accessed=int(bytes_accessed)),
    )(x, w_slab, b_slab)
    return out.reshape(batch, 1)


def init_params(key, sphere_dim, n_hidden, *, weight_dtype=jnp.bfloat16):
    """PyTorch-default-like uniform init, packed into two slabs:
       w_slab: (5*n_hidden, max(sphere_dim, n_hidden)) bf16, rows l*n:(l+1)*n = W_{l+1} (out,in), zero-padded on the in-dim.
       b_slab: (n_hidden, 8) f32, column l = bias of layer l+1 (l=0..4), column 5 = w6."""
    keys = jax.random.split(key, 11)

    def uni(k, shape, fan_in):
        bound = 1.0 / float(fan_in) ** 0.5
        return jax.random.uniform(k, shape, jnp.float32, -bound, bound)

    # PyTorch nn.Linear layout: weight (out, in), bias (out,)
    w = [uni(keys[0], (n_hidden, sphere_dim), sphere_dim)]
    b = [uni(keys[1], (n_hidden,), sphere_dim)]
    for l in range(4):
        w.append(uni(keys[2 + 2 * l], (n_hidden, n_hidden), n_hidden))
        b.append(uni(keys[3 + 2 * l], (n_hidden,), n_hidden))
    w6 = uni(keys[10], (n_hidden,), n_hidden)       # L6: (1, n_hidden), bias=False

    in_w = max(sphere_dim, n_hidden)

    def pad_in(wl):
        return jnp.zeros((n_hidden, in_w), jnp.float32).at[:, :wl.shape[1]].set(wl)

    w_slab = jnp.concatenate([pad_in(wl) for wl in w], axis=0).astype(weight_dtype)

    b_slab = jnp.zeros((n_hidden, 8), jnp.float32)
    for l in range(5):
        b_slab = b_slab.at[:, l].set(b[l])
    b_slab = b_slab.at[:, 5].set(w6)

    return {"w_slab": w_slab, "b_slab": b_slab}


def reference_forward(x, params):
    """Pure-JAX f32 reference on the same (bf16-quantized) packed parameters."""
    w_slab = params["w_slab"].astype(jnp.float32)
    b_slab = params["b_slab"]
    n = b_slab.shape[0]
    sphere_dim = x.shape[1]
    h = x.astype(jnp.float32)
    h = jnp.maximum(h @ w_slab[0:n, :sphere_dim].T + b_slab[:, 0], 0.0)
    for l in range(1, 5):
        h = jnp.maximum(h @ w_slab[l * n:(l + 1) * n, :n].T + b_slab[:, l], 0.0)
    return h @ b_slab[:, 5:6]


def _check(out, ref, tol=3e-2):
    err = float(jnp.max(jnp.abs(out - ref)))
    scale = 1.0 + float(jnp.max(jnp.abs(ref)))
    assert err <= tol * scale, f"max abs err {err} vs scale {scale}"


if __name__ == "__main__":
    sphere_dim, n_hidden = 16, 32
    key = jax.random.PRNGKey(0)
    kx, kx2, kp = jax.random.split(key, 3)
    params = init_params(kp, sphere_dim, n_hidden)

    # Small batch: single block (grid=(1,)), blocks equal to full array dims.
    x_small = jax.random.normal(kx, (16, sphere_dim), dtype=jnp.float32)
    out_small = jax.block_until_ready(large_relu_forward(x_small, params))
    assert out_small.shape == (16, 1)
    _check(out_small, reference_forward(x_small, params))

    # Larger batch: multi-step "parallel" grid (2 steps -> both TCs on v7x).
    x_large = jax.random.normal(kx2, (512, sphere_dim), dtype=jnp.float32)
    out_large = jax.block_until_ready(large_relu_forward(x_large, params))
    assert out_large.shape == (512, 1)
    _check(out_large, reference_forward(x_large, params))

    print("KERNEL_OK")
</pallas_src>

<mosaic_0001>
module attributes {stable_mosaic.version = 11 : i64} {
  func.func @_mlp_kernel(%arg0: i32, %arg1: memref<16x16xf32, #tpu.memory_space<vmem>>, %arg2: memref<160x32xbf16, #tpu.memory_space<vmem>>, %arg3: memref<32x8xf32, #tpu.memory_space<vmem>>, %arg4: memref<1x16xf32, #tpu.memory_space<vmem>>) attributes {dimension_semantics = [#tpu.dimension_semantics<parallel>], iteration_bounds = array<i64: 1>, scalar_prefetch = 0 : i64, scratch_operands = 0 : i64, tpu.core_type = #tpu.core_type<tc>, window_params = [{transform_indices = @transform_0, window_bounds = array<i64: 16, 16>}, {pipeline_mode = #tpu.pipeline_mode<synchronous>, transform_indices = @transform_1, window_bounds = array<i64: 160, 32>}, {pipeline_mode = #tpu.pipeline_mode<synchronous>, transform_indices = @transform_2, window_bounds = array<i64: 32, 8>}, {transform_indices = @transform_3, window_bounds = array<i64: 1, 16>}]} {
    %c0 = arith.constant 0 : index
    %c0_0 = arith.constant 0 : index
    %0 = vector.load %arg1[%c0, %c0_0] : memref<16x16xf32, #tpu.memory_space<vmem>>, vector<16x16xf32>
    %1 = arith.truncf %0 : vector<16x16xf32> to vector<16x16xbf16>
    %c0_1 = arith.constant 0 : index
    %c0_2 = arith.constant 0 : index
    %2 = vector.load %arg2[%c0_1, %c0_2] : memref<160x32xbf16, #tpu.memory_space<vmem>>, vector<32x16xbf16>
    %cst = arith.constant dense<0.000000e+00> : vector<32x16xf32>
    %3 = tpu.matmul %2, %1, %cst {dimension_numbers = #tpu.dot_dimension_numbers<[1], [1], [0], [0], [0, 0, 1, 0], [], []>} : vector<32x16xbf16>, vector<16x16xbf16>, vector<32x16xf32> -> vector<32x16xf32>
    %c0_3 = arith.constant 0 : index
    %c0_4 = arith.constant 0 : index
    %4 = vector.load %arg3[%c0_3, %c0_4] : memref<32x8xf32, #tpu.memory_space<vmem>>, vector<32x1xf32>
    %5 = vector.broadcast %4 : vector<32x1xf32> to vector<32x16xf32>
    %6 = arith.addf %3, %5 : vector<32x16xf32>
    %cst_5 = arith.constant 0.000000e+00 : f32
    %7 = vector.broadcast %cst_5 : f32 to vector<32x16xf32>
    %8 = arith.maximumf %6, %7 : vector<32x16xf32>
    %9 = arith.truncf %8 : vector<32x16xf32> to vector<32x16xbf16>
    %c32 = arith.constant 32 : index
    %c0_6 = arith.constant 0 : index
    %10 = vector.load %arg2[%c32, %c0_6] : memref<160x32xbf16, #tpu.memory_space<vmem>>, vector<32x32xbf16>
    %cst_7 = arith.constant dense<0.000000e+00> : vector<32x16xf32>
    %11 = tpu.matmul %10, %9, %cst_7 {dimension_numbers = #tpu.dot_dimension_numbers<[1], [0], [0], [1], [0, 0, 1, 1], [], []>} : vector<32x32xbf16>, vector<32x16xbf16>, vector<32x16xf32> -> vector<32x16xf32>
    %c0_8 = arith.constant 0 : index
    %c1 = arith.constant 1 : index
    %12 = vector.load %arg3[%c0_8, %c1] : memref<32x8xf32, #tpu.memory_space<vmem>>, vector<32x1xf32>
    %13 = vector.broadcast %12 : vector<32x1xf32> to vector<32x16xf32>
    %14 = arith.addf %11, %13 : vector<32x16xf32>
    %cst_9 = arith.constant 0.000000e+00 : f32
    %15 = vector.broadcast %cst_9 : f32 to vector<32x16xf32>
    %16 = arith.maximumf %14, %15 : vector<32x16xf32>
    %17 = arith.truncf %16 : vector<32x16xf32> to vector<32x16xbf16>
    %c64 = arith.constant 64 : index
    %c0_10 = arith.constant 0 : index
    %18 = vector.load %arg2[%c64, %c0_10] : memref<160x32xbf16, #tpu.memory_space<vmem>>, vector<32x32xbf16>
    %cst_11 = arith.constant dense<0.000000e+00> : vector<32x16xf32>
    %19 = tpu.matmul %18, %17, %cst_11 {dimension_numbers = #tpu.dot_dimension_numbers<[1], [0], [0], [1], [0, 0, 1, 1], [], []>} : vector<32x32xbf16>, vector<32x16xbf16>, vector<32x16xf32> -> vector<32x16xf32>
    %c0_12 = arith.constant 0 : index
    %c2 = arith.constant 2 : index
    %20 = vector.load %arg3[%c0_12, %c2] : memref<32x8xf32, #tpu.memory_space<vmem>>, vector<32x1xf32>
    %21 = vector.broadcast %20 : vector<32x1xf32> to vector<32x16xf32>
    %22 = arith.addf %19, %21 : vector<32x16xf32>
    %cst_13 = arith.constant 0.000000e+00 : f32
    %23 = vector.broadcast %cst_13 : f32 to vector<32x16xf32>
    %24 = arith.maximumf %22, %23 : vector<32x16xf32>
    %25 = arith.truncf %24 : vector<32x16xf32> to vector<32x16xbf16>
    %c96 = arith.constant 96 : index
    %c0_14 = arith.constant 0 : index
    %26 = vector.load %arg2[%c96, %c0_14] : memref<160x32xbf16, #tpu.memory_space<vmem>>, vector<32x32xbf16>
    %cst_15 = arith.constant dense<0.000000e+00> : vector<32x16xf32>
    %27 = tpu.matmul %26, %25, %cst_15 {dimension_numbers = #tpu.dot_dimension_numbers<[1], [0], [0], [1], [0, 0, 1, 1], [], []>} : vector<32x32xbf16>, vector<32x16xbf16>, vector<32x16xf32> -> vector<32x16xf32>
    %c0_16 = arith.constant 0 : index
    %c3 = arith.constant 3 : index
    %28 = vector.load %arg3[%c0_16, %c3] : memref<32x8xf32, #tpu.memory_space<vmem>>, vector<32x1xf32>
    %29 = vector.broadcast %28 : vector<32x1xf32> to vector<32x16xf32>
    %30 = arith.addf %27, %29 : vector<32x16xf32>
    %cst_17 = arith.constant 0.000000e+00 : f32
    %31 = vector.broadcast %cst_17 : f32 to vector<32x16xf32>
    %32 = arith.maximumf %30, %31 : vector<32x16xf32>
    %33 = arith.truncf %32 : vector<32x16xf32> to vector<32x16xbf16>
    %c128 = arith.constant 128 : index
    %c0_18 = arith.constant 0 : index
    %34 = vector.load %arg2[%c128, %c0_18] : memref<160x32xbf16, #tpu.memory_space<vmem>>, vector<32x32xbf16>
    %cst_19 = arith.constant dense<0.000000e+00> : vector<32x16xf32>
    %35 = tpu.matmul %34, %33, %cst_19 {dimension_numbers = #tpu.dot_dimension_numbers<[1], [0], [0], [1], [0, 0, 1, 1], [], []>} : vector<32x32xbf16>, vector<32x16xbf16>, vector<32x16xf32> -> vector<32x16xf32>
    %c0_20 = arith.constant 0 : index
    %c4 = arith.constant 4 : index
    %36 = vector.load %arg3[%c0_20, %c4] : memref<32x8xf32, #tpu.memory_space<vmem>>, vector<32x1xf32>
    %37 = vector.broadcast %36 : vector<32x1xf32> to vector<32x16xf32>
    %38 = arith.addf %35, %37 : vector<32x16xf32>
    %cst_21 = arith.constant 0.000000e+00 : f32
    %39 = vector.broadcast %cst_21 : f32 to vector<32x16xf32>
    %40 = arith.maximumf %38, %39 : vector<32x16xf32>
    %41 = arith.truncf %40 : vector<32x16xf32> to vector<32x16xbf16>
    %42 = arith.extf %41 : vector<32x16xbf16> to vector<32x16xf32>
    %c0_22 = arith.constant 0 : index
    %c5 = arith.constant 5 : index
    %43 = vector.load %arg3[%c0_22, %c5] : memref<32x8xf32, #tpu.memory_space<vmem>>, vector<32x1xf32>
    %44 = vector.broadcast %43 : vector<32x1xf32> to vector<32x16xf32>
    %45 = arith.mulf %42, %44 : vector<32x16xf32>
    %cst_23 = arith.constant dense<0.000000e+00> : vector<16xf32>
    %46 = vector.multi_reduction <add>, %45, %cst_23 [0] : vector<32x16xf32> to vector<16xf32>
    %47 = vector.shape_cast %46 : vector<16xf32> to vector<1x16xf32>
    %c0_24 = arith.constant 0 : index
    %c0_25 = arith.constant 0 : index
    %48 = vector.load %arg4[%c0_24, %c0_25] : memref<1x16xf32, #tpu.memory_space<vmem>>, vector<1x16xf32>
    tpu.vector_store %arg4[%c0_24, %c0_25], %47 {strides = array<i32>} : memref<1x16xf32, #tpu.memory_space<vmem>>, vector<1x16xf32>,
    return
  }
  func.func @transform_0(%arg0: i32) -> (i32, i32) {
    %c0_i32 = arith.constant 0 : i32
    %c0_i32_0 = arith.constant 0 : i32
    return %arg0, %c0_i32 : i32, i32
  }
  func.func @transform_1(%arg0: i32) -> (i32, i32) {
    %c0_i32 = arith.constant 0 : i32
    %c0_i32_0 = arith.constant 0 : i32
    %c0_i32_1 = arith.constant 0 : i32
    return %c0_i32, %c0_i32_0 : i32, i32
  }
  func.func @transform_2(%arg0: i32) -> (i32, i32) {
    %c0_i32 = arith.constant 0 : i32
    %c0_i32_0 = arith.constant 0 : i32
    %c0_i32_1 = arith.constant 0 : i32
    return %c0_i32, %c0_i32_0 : i32, i32
  }
  func.func @transform_3(%arg0: i32) -> (i32, i32) {
    %c0_i32 = arith.constant 0 : i32
    %c0_i32_0 = arith.constant 0 : i32
    return %c0_i32, %arg0 : i32, i32
  }
}

</mosaic_0001>

<llo_original>
// kernel: tpu_custom_call.1
$region0: #{tpu_custom_call.1}
  #allocation0 [shape = 'u32[]', space=smem, size = 0x4, offset = 0x4, fixed_abs, tag = 'smem constant byte address 0x4 - core index']
  #allocation1 [shape = 'u32[144,128]{1,0:T(1,128)}', space=vmem, size = 0x12000, scoped, tag = 'internal scratch']
  %s0 = inlined_call_operand.vmem [shape: f32[16,16], index: 0, kind: input, shape index: {}]
  %s1 = inlined_call_operand.vmem [shape: bf16[160,32], index: 1, kind: input, shape index: {}]
  %s2 = inlined_call_operand.vmem [shape: f32[32,8], index: 2, kind: input, shape index: {}]
  %s3 = inlined_call_operand.hbm [shape: f32[1,16], index: 3, kind: output, shape index: {}]
  %s4 = sld [smem:[#allocation0]]
  $region22: #{tpu_custom_call.1} parent=0
    _
  %s6 = ssub.s32 1, %s4
  %s7 = scalar_select 0, %s6, %s4
  $region1: #{tpu_custom_call.1} parent=0
    #allocation2 [shape = 'u8[512]{0}', space=vmem, size = 0x400, scoped, tag = 'output window, operand 0, single buffered']
    #allocation3 [shape = 's32[1]{0}', space=sflag, size = 0x4, scoped, tag = 'scoped memory for tpu_custom_call.1']
    %8 = vsyncpa [#allocation3], 0
    // Predicated region
    $region2: #{tpu_custom_call.1} parent=1 // pred_check
      _
    $region3: #{tpu_custom_call.1} parent=1 // pred_check_branch
      %10 = sbr.rel (0) target = $region5
    $region4: #{tpu_custom_call.1} parent=1 // pred_region
      _
    $region5: #{tpu_custom_call.1} parent=1 // pred_fallthru
      _
    // Predicated region
    $region6: #{tpu_custom_call.1} parent=1 // pred_check
      _
    $region7: #{tpu_custom_call.1} parent=1 // pred_check_branch
      %12 = sbr.rel (0) target = $region9
    $region8: #{tpu_custom_call.1} parent=1 // pred_region
      _
    $region9: #{tpu_custom_call.1} parent=1 // pred_fallthru
      _
    // Predicated region
    $region10: #{tpu_custom_call.1} parent=1 // pred_check
      _
    $region11: #{tpu_custom_call.1} parent=1 // pred_check_branch
      %14 = sbr.rel (0) target = $region13
    $region12: #{tpu_custom_call.1} parent=1 // pred_region
      _
    $region13: #{tpu_custom_call.1} parent=1 // pred_fallthru
      _
    %v16 = vld [vmem:[%s0] sm:$0xff]
    %v17 = vld [vmem:[%s0 + $0x8] sm:$0xff]
    %v18 = vpack.c.bf16 %v17, %v16
    %v19 = vld [vmem:[%s1] sm:$0xf]
    %v20 = vld [vmem:[%s1 + $0x4] sm:$0xf]
    %v21 = vld [vmem:[%s1 + $0x8] sm:$0xf]
    %v22 = vld [vmem:[%s1 + $0xc] sm:$0xf]
    %v23 = vld [vmem:[%s2] sm:$0xff]
    %v24 = vld [vmem:[%s2 + $0x8] sm:$0xff]
    %v25 = vld [vmem:[%s2 + $0x10] sm:$0xff]
    %v26 = vld [vmem:[%s2 + $0x18] sm:$0xff]
    %28 = vset.pattern.permute.xlu0 0
    %29 = vperm.xlu0 %28, %v23
    %v30 = vpop.permute.xlu0 %29
    %33 = vset.pattern.permute.xlu0 0
    %34 = vperm.xlu0 %33, %v24
    %v35 = vpop.permute.xlu0 %34
    %38 = vset.pattern.permute.xlu0 0
    %39 = vperm.xlu0 %38, %v25
    %v40 = vpop.permute.xlu0 %39
    %43 = vset.pattern.permute.xlu0 0
    %44 = vperm.xlu0 %43, %v26
    %v45 = vpop.permute.xlu0 %44
    %v51 = vunpack.c.l.b16 %v19
    %v52 = vunpack.c.l.b16 %v20
    %v53 = vunpack.c.l.b16 %v21
    %v54 = vunpack.c.l.b16 %v22
    %v55 = vpack.c.b16 %v52, %v51
    %v56 = vpack.c.b16 %v54, %v53
    %vm57 = vcmask 130048
    %v59 = vsel %vm57, %v55, 0
    %v62 = vsel %vm57, %v56, 0
    %v65 = vsel %vm57, %v18, 0
    %67 = vmatprep.subr.bf16.mxu0 0
    %68 = vmatpush1.bf16.xpose.msra.mxu0 %v65
    %69 = vmatprep.subr.bf16.mxu0 0
    %70 = vmatpush1.bf16.xpose.msra.mxu0 0
    %71 = vmatprep.subr.bf16.mxu0 0
    %72 = vmatpush1.bf16.xpose.msra.mxu0 0
    %73 = vmatprep.subr.bf16.mxu0 0
    %74 = vmatpush1.bf16.xpose.msra.mxu0 0
    %75 = vmatprep.subr.bf16.mxu0 0
    %76 = vmatpush1.bf16.xpose.msra.mxu0 0
    %77 = vmatprep.subr.bf16.mxu0 0
    %78 = vmatpush1.bf16.xpose.msra.mxu0 0
    %79 = vmatprep.subr.bf16.mxu0 0
    %80 = vmatpush1.bf16.xpose.msra.mxu0 0
    %81 = vmatprep.subr.bf16.mxu0 0
    %82 = vmatpush1.bf16.xpose.msra.mxu0 0
    %83 = vmatprep.subr.bf16.mxu0 0
    %84 = vmatpush1.bf16.xpose.msra.mxu0 0
    %85 = vmatprep.subr.bf16.mxu0 0
    %86 = vmatpush1.bf16.xpose.msra.mxu0 0
    %87 = vmatprep.subr.bf16.mxu0 0
    %88 = vmatpush1.bf16.xpose.msra.mxu0 0
    %89 = vmatprep.subr.bf16.mxu0 0
    %90 = vmatpush1.bf16.xpose.msra.mxu0 0
    %91 = vmatprep.subr.bf16.mxu0 0
    %92 = vmatpush1.bf16.xpose.msra.mxu0 0
    %93 = vmatprep.subr.bf16.mxu0 0
    %94 = vmatpush1.bf16.xpose.msra.mxu0 0
    %95 = vmatprep.subr.bf16.mxu0 0
    %96 = vmatpush1.bf16.xpose.msra.mxu0 0
    %97 = vmatprep.subr.bf16.mxu0 0
    %98 = vmatpush1.bf16.xpose.msra.mxu0 0
    %99 = vmatprep.mubr.bf16.mxu0 0
    %100 = vmatmul.mubr.bf16.gmra.mrb[0].mxu0 %v59
    %v101 = vpop.f32.mrb[0].mxu0
    %v102 = vadd.f32 %v30, %v101
    %v103 = vpop.f32.mrb[0].mxu0
    %v104 = vpop.f32.mrb[0].mxu0
    %v105 = vadd.f32 %v35, %v104
    %v106 = vpop.f32.mrb[0].mxu0
    %107 = vmatprep.mubr.bf16.mxu0 0
    %108 = vmatmul.mubr.bf16.gmra.mrb[0].mxu0 %v62
    %v109 = vpop.f32.mrb[0].mxu0
    %v110 = vadd.f32 %v40, %v109
    %v111 = vpop.f32.mrb[0].mxu0
    %v112 = vpop.f32.mrb[0].mxu0
    %v113 = vadd.f32 %v45, %v112
    %v114 = vpop.f32.mrb[0].mxu0
    %115 = vdwg.mxu0
    %v116 = vmax.f32 %v102, 0.0
    %v117 = vmax.f32 %v105, 0.0
    %v118 = vmax.f32 %v110, 0.0
    %v119 = vmax.f32 %v113, 0.0
    %v120 = vpack.c.bf16 %v117, %v116
    %v121 = vpack.c.bf16 %v119, %v118
    %v122 = vld [vmem:[%s1 + $0x10] sm:$0xf]
    %v123 = vld [vmem:[%s1 + $0x14] sm:$0xf]
    %v124 = vld [vmem:[%s1 + $0x18] sm:$0xf]
    %v125 = vld [vmem:[%s1 + $0x1c] sm:$0xf]
    %126 = vset.pattern.permute.xlu0 1
    %127 = vperm.xlu0 %126, %v23
    %v128 = vpop.permute.xlu0 %127
    %130 = vset.pattern.permute.xlu0 1
    %131 = vperm.xlu0 %130, %v24
    %v132 = vpop.permute.xlu0 %131
    %134 = vset.pattern.permute.xlu0 1
    %135 = vperm.xlu0 %134, %v25
    %v136 = vpop.permute.xlu0 %135
    %138 = vset.pattern.permute.xlu0 1
    %139 = vperm.xlu0 %138, %v26
    %v140 = vpop.permute.xlu0 %139
    %v146 = vunpack.c.l.b16 %v122
    %v147 = vunpack.c.l.b16 %v123
    %v148 = vunpack.c.l.b16 %v124
    %v149 = vunpack.c.l.b16 %v125
    %v150 = vpack.c.b16 %v147, %v146
    %v151 = vpack.c.b16 %v149, %v148
    %vm152 = vcmask 261120
    %v154 = vsel %vm152, %v150, 0
    %v157 = vsel %vm152, %v151, 0
    %159 = vmatprep.subr.bf16.mxu0 0
    %160 = vmatpush1.bf16.msra.mxu0 %v120
    %161 = vmatprep.subr.bf16.mxu0 0
    %162 = vmatpush1.bf16.msra.mxu0 %v121
    %163 = vmatprep.subr.bf16.mxu0 0
    %164 = vmatpush1.bf16.msra.mxu0 0
    %165 = vmatprep.subr.bf16.mxu0 0
    %166 = vmatpush1.bf16.msra.mxu0 0
    %167 = vmatprep.subr.bf16.mxu0 0
    %168 = vmatpush1.bf16.msra.mxu0 0
    %169 = vmatprep.subr.bf16.mxu0 0
    %170 = vmatpush1.bf16.msra.mxu0 0
    %171 = vmatprep.subr.bf16.mxu0 0
    %172 = vmatpush1.bf16.msra.mxu0 0
    %173 = vmatprep.subr.bf16.mxu0 0
    %174 = vmatpush1.bf16.msra.mxu0 0
    %175 = vmatprep.subr.bf16.mxu0 0
    %176 = vmatpush1.bf16.msra.mxu0 0
    %177 = vmatprep.subr.bf16.mxu0 0
    %178 = vmatpush1.bf16.msra.mxu0 0
    %179 = vmatprep.subr.bf16.mxu0 0
    %180 = vmatpush1.bf16.msra.mxu0 0
    %181 = vmatprep.subr.bf16.mxu0 0
    %182 = vmatpush1.bf16.msra.mxu0 0
    %183 = vmatprep.subr.bf16.mxu0 0
    %184 = vmatpush1.bf16.msra.mxu0 0
    %185 = vmatprep.subr.bf16.mxu0 0
    %186 = vmatpush1.bf16.msra.mxu0 0
    %187 = vmatprep.subr.bf16.mxu0 0
    %188 = vmatpush1.bf16.msra.mxu0 0
    %189 = vmatprep.subr.bf16.mxu0 0
    %190 = vmatpush1.bf16.msra.mxu0 0
    %191 = vmatprep.mubr.bf16.mxu0 0
    %192 = vmatmul.mubr.bf16.gmra.mrb[0].mxu0 %v154
    %v193 = vpop.f32.mrb[0].mxu0
    %v194 = vadd.f32 %v128, %v193
    %v195 = vpop.f32.mrb[0].mxu0
    %v196 = vpop.f32.mrb[0].mxu0
    %v197 = vadd.f32 %v132, %v196
    %v198 = vpop.f32.mrb[0].mxu0
    %199 = vmatprep.mubr.bf16.mxu0 0
    %200 = vmatmul.mubr.bf16.gmra.mrb[0].mxu0 %v157
    %v201 = vpop.f32.mrb[0].mxu0
    %v202 = vadd.f32 %v136, %v201
    %v203 = vpop.f32.mrb[0].mxu0
    %v204 = vpop.f32.mrb[0].mxu0
    %v205 = vadd.f32 %v140, %v204
    %v206 = vpop.f32.mrb[0].mxu0
    %207 = vdwg.mxu0
    %v208 = vmax.f32 %v194, 0.0
    %v209 = vmax.f32 %v197, 0.0
    %v210 = vmax.f32 %v202, 0.0
    %v211 = vmax.f32 %v205, 0.0
    %v212 = vpack.c.bf16 %v209, %v208
    %v213 = vpack.c.bf16 %v211, %v210
    %v214 = vld [vmem:[%s1 + $0x20] sm:$0xf]
    %v215 = vld [vmem:[%s1 + $0x24] sm:$0xf]
    %v216 = vld [vmem:[%s1 + $0x28] sm:$0xf]
    %v217 = vld [vmem:[%s1 + $0x2c] sm:$0xf]
    %218 = vset.pattern.permute.xlu0 2
    %219 = vperm.xlu0 %218, %v23
    %v220 = vpop.permute.xlu0 %219
    %222 = vset.pattern.permute.xlu0 2
    %223 = vperm.xlu0 %222, %v24
    %v224 = vpop.permute.xlu0 %223
    %226 = vset.pattern.permute.xlu0 2
    %227 = vperm.xlu0 %226, %v25
    %v228 = vpop.permute.xlu0 %227
    %230 = vset.pattern.permute.xlu0 2
    %231 = vperm.xlu0 %230, %v26
    %v232 = vpop.permute.xlu0 %231
    %v238 = vunpack.c.l.b16 %v214
    %v239 = vunpack.c.l.b16 %v215
    %v240 = vunpack.c.l.b16 %v216
    %v241 = vunpack.c.l.b16 %v217
    %v242 = vpack.c.b16 %v239, %v238
    %v243 = vpack.c.b16 %v241, %v240
    %v245 = vsel %vm152, %v242, 0
    %v248 = vsel %vm152, %v243, 0
    %250 = vmatprep.subr.bf16.mxu0 0
    %251 = vmatpush1.bf16.msra.mxu0 %v212
    %252 = vmatprep.subr.bf16.mxu0 0
    %253 = vmatpush1.bf16.msra.mxu0 %v213
    %254 = vmatprep.subr.bf16.mxu0 0
    %255 = vmatpush1.bf16.msra.mxu0 0
    %256 = vmatprep.subr.bf16.mxu0 0
    %257 = vmatpush1.bf16.msra.mxu0 0
    %258 = vmatprep.subr.bf16.mxu0 0
    %259 = vmatpush1.bf16.msra.mxu0 0
    %260 = vmatprep.subr.bf16.mxu0 0
    %261 = vmatpush1.bf16.msra.mxu0 0
    %262 = vmatprep.subr.bf16.mxu0 0
    %263 = vmatpush1.bf16.msra.mxu0 0
    %264 = vmatprep.subr.bf16.mxu0 0
    %265 = vmatpush1.bf16.msra.mxu0 0
    %266 = vmatprep.subr.bf16.mxu0 0
    %267 = vmatpush1.bf16.msra.mxu0 0
    %268 = vmatprep.subr.bf16.mxu0 0
    %269 = vmatpush1.bf16.msra.mxu0 0
    %270 = vmatprep.subr.bf16.mxu0 0
    %271 = vmatpush1.bf16.msra.mxu0 0
    %272 = vmatprep.subr.bf16.mxu0 0
    %273 = vmatpush1.bf16.msra.mxu0 0
    %274 = vmatprep.subr.bf16.mxu0 0
    %275 = vmatpush1.bf16.msra.mxu0 0
    %276 = vmatprep.subr.bf16.mxu0 0
    %277 = vmatpush1.bf16.msra.mxu0 0
    %278 = vmatprep.subr.bf16.mxu0 0
    %279 = vmatpush1.bf16.msra.mxu0 0
    %280 = vmatprep.subr.bf16.mxu0 0
    %281 = vmatpush1.bf16.msra.mxu0 0
    %282 = vmatprep.mubr.bf16.mxu0 0
    %283 = vmatmul.mubr.bf16.gmra.mrb[0].mxu0 %v245
    %v284 = vpop.f32.mrb[0].mxu0
    %v285 = vadd.f32 %v220, %v284
    %v286 = vpop.f32.mrb[0].mxu0
    %v287 = vpop.f32.mrb[0].mxu0
    %v288 = vadd.f32 %v224, %v287
    %v289 = vpop.f32.mrb[0].mxu0
    %290 = vmatprep.mubr.bf16.mxu0 0
    %291 = vmatmul.mubr.bf16.gmra.mrb[0].mxu0 %v248
    %v292 = vpop.f32.mrb[0].mxu0
    %v293 = vadd.f32 %v228, %v292
    %v294 = vpop.f32.mrb[0].mxu0
    %v295 = vpop.f32.mrb[0].mxu0
    %v296 = vadd.f32 %v232, %v295
    %v297 = vpop.f32.mrb[0].mxu0
    %298 = vdwg.mxu0
    %v299 = vmax.f32 %v285, 0.0
    %v300 = vmax.f32 %v288, 0.0
    %v301 = vmax.f32 %v293, 0.0
    %v302 = vmax.f32 %v296, 0.0
    %v303 = vpack.c.bf16 %v300, %v299
    %v304 = vpack.c.bf16 %v302, %v301
    %v305 = vld [vmem:[%s1 + $0x30] sm:$0xf]
    %v306 = vld [vmem:[%s1 + $0x34] sm:$0xf]
    %v307 = vld [vmem:[%s1 + $0x38] sm:$0xf]
    %v308 = vld [vmem:[%s1 + $0x3c] sm:$0xf]
    %309 = vset.pattern.permute.xlu0 3
    %310 = vperm.xlu0 %309, %v23
    %v311 = vpop.permute.xlu0 %310
    %313 = vset.pattern.permute.xlu0 3
    %314 = vperm.xlu0 %313, %v24
    %v315 = vpop.permute.xlu0 %314
    %317 = vset.pattern.permute.xlu0 3
    %318 = vperm.xlu0 %317, %v25
    %v319 = vpop.permute.xlu0 %318
    %321 = vset.pattern.permute.xlu0 3
    %322 = vperm.xlu0 %321, %v26
    %v323 = vpop.permute.xlu0 %322
    %v329 = vunpack.c.l.b16 %v305
    %v330 = vunpack.c.l.b16 %v306
    %v331 = vunpack.c.l.b16 %v307
    %v332 = vunpack.c.l.b16 %v308
    %v333 = vpack.c.b16 %v330, %v329
    %v334 = vpack.c.b16 %v332, %v331
    %v336 = vsel %vm152, %v333, 0
    %v339 = vsel %vm152, %v334, 0
    %341 = vmatprep.subr.bf16.mxu0 0
    %342 = vmatpush1.bf16.msra.mxu0 %v303
    %343 = vmatprep.subr.bf16.mxu0 0
    %344 = vmatpush1.bf16.msra.mxu0 %v304
    %345 = vmatprep.subr.bf16.mxu0 0
    %346 = vmatpush1.bf16.msra.mxu0 0
    %347 = vmatprep.subr.bf16.mxu0 0
    %348 = vmatpush1.bf16.msra.mxu0 0
    %349 = vmatprep.subr.bf16.mxu0 0
    %350 = vmatpush1.bf16.msra.mxu0 0
    %351 = vmatprep.subr.bf16.mxu0 0
    %352 = vmatpush1.bf16.msra.mxu0 0
    %353 = vmatprep.subr.bf16.mxu0 0
    %354 = vmatpush1.bf16.msra.mxu0 0
    %355 = vmatprep.subr.bf16.mxu0 0
    %356 = vmatpush1.bf16.msra.mxu0 0
    %357 = vmatprep.subr.bf16.mxu0 0
    %358 = vmatpush1.bf16.msra.mxu0 0
    %359 = vmatprep.subr.bf16.mxu0 0
    %360 = vmatpush1.bf16.msra.mxu0 0
    %361 = vmatprep.subr.bf16.mxu0 0
    %362 = vmatpush1.bf16.msra.mxu0 0
    %363 = vmatprep.subr.bf16.mxu0 0
    %364 = vmatpush1.bf16.msra.mxu0 0
    %365 = vmatprep.subr.bf16.mxu0 0
    %366 = vmatpush1.bf16.msra.mxu0 0
    %367 = vmatprep.subr.bf16.mxu0 0
    %368 = vmatpush1.bf16.msra.mxu0 0
    %369 = vmatprep.subr.bf16.mxu0 0
    %370 = vmatpush1.bf16.msra.mxu0 0
    %371 = vmatprep.subr.bf16.mxu0 0
    %372 = vmatpush1.bf16.msra.mxu0 0
    %373 = vmatprep.mubr.bf16.mxu0 0
    %374 = vmatmul.mubr.bf16.gmra.mrb[0].mxu0 %v336
    %v375 = vpop.f32.mrb[0].mxu0
    %v376 = vadd.f32 %v311, %v375
    %v377 = vpop.f32.mrb[0].mxu0
    %v378 = vpop.f32.mrb[0].mxu0
    %v379 = vadd.f32 %v315, %v378
    %v380 = vpop.f32.mrb[0].mxu0
    %381 = vmatprep.mubr.bf16.mxu0 0
    %382 = vmatmul.mubr.bf16.gmra.mrb[0].mxu0 %v339
    %v383 = vpop.f32.mrb[0].mxu0
    %v384 = vadd.f32 %v319, %v383
    %v385 = vpop.f32.mrb[0].mxu0
    %v386 = vpop.f32.mrb[0].mxu0
    %v387 = vadd.f32 %v323, %v386
    %v388 = vpop.f32.mrb[0].mxu0
    %389 = vdwg.mxu0
    %v390 = vmax.f32 %v376, 0.0
    %v391 = vmax.f32 %v379, 0.0
    %v392 = vmax.f32 %v384, 0.0
    %v393 = vmax.f32 %v387, 0.0
    %v394 = vpack.c.bf16 %v391, %v390
    %v395 = vpack.c.bf16 %v393, %v392
    %v396 = vld [vmem:[%s1 + $0x40] sm:$0xf]
    %v397 = vld [vmem:[%s1 + $0x44] sm:$0xf]
    %v398 = vld [vmem:[%s1 + $0x48] sm:$0xf]
    %v399 = vld [vmem:[%s1 + $0x4c] sm:$0xf]
    %400 = vset.pattern.permute.xlu0 4
    %401 = vperm.xlu0 %400, %v23
    %v402 = vpop.permute.xlu0 %401
    %404 = vset.pattern.permute.xlu0 4
    %405 = vperm.xlu0 %404, %v24
    %v406 = vpop.permute.xlu0 %405
    %408 = vset.pattern.permute.xlu0 4
    %409 = vperm.xlu0 %408, %v25
    %v410 = vpop.permute.xlu0 %409
    %412 = vset.pattern.permute.xlu0 4
    %413 = vperm.xlu0 %412, %v26
    %v414 = vpop.permute.xlu0 %413
    %v420 = vunpack.c.l.b16 %v396
    %v421 = vunpack.c.l.b16 %v397
    %v422 = vunpack.c.l.b16 %v398
    %v423 = vunpack.c.l.b16 %v399
    %v424 = vpack.c.b16 %v421, %v420
    %v425 = vpack.c.b16 %v423, %v422
    %v427 = vsel %vm152, %v424, 0
    %v430 = vsel %vm152, %v425, 0
    %432 = vmatprep.subr.bf16.mxu0 0
    %433 = vmatpush1.bf16.msra.mxu0 %v394
    %434 = vmatprep.subr.bf16.mxu0 0
    %435 = vmatpush1.bf16.msra.mxu0 %v395
    %436 = vmatprep.subr.bf16.mxu0 0
    %437 = vmatpush1.bf16.msra.mxu0 0
    %438 = vmatprep.subr.bf16.mxu0 0
    %439 = vmatpush1.bf16.msra.mxu0 0
    %440 = vmatprep.subr.bf16.mxu0 0
    %441 = vmatpush1.bf16.msra.mxu0 0
    %442 = vmatprep.subr.bf16.mxu0 0
    %443 = vmatpush1.bf16.msra.mxu0 0
    %444 = vmatprep.subr.bf16.mxu0 0
    %445 = vmatpush1.bf16.msra.mxu0 0
    %446 = vmatprep.subr.bf16.mxu0 0
    %447 = vmatpush1.bf16.msra.mxu0 0
    %448 = vmatprep.subr.bf16.mxu0 0
    %449 = vmatpush1.bf16.msra.mxu0 0
    %450 = vmatprep.subr.bf16.mxu0 0
    %451 = vmatpush1.bf16.msra.mxu0 0
    %452 = vmatprep.subr.bf16.mxu0 0
    %453 = vmatpush1.bf16.msra.mxu0 0
    %454 = vmatprep.subr.bf16.mxu0 0
    %455 = vmatpush1.bf16.msra.mxu0 0
    %456 = vmatprep.subr.bf16.mxu0 0
    %457 = vmatpush1.bf16.msra.mxu0 0
    %458 = vmatprep.subr.bf16.mxu0 0
    %459 = vmatpush1.bf16.msra.mxu0 0
    %460 = vmatprep.subr.bf16.mxu0 0
    %461 = vmatpush1.bf16.msra.mxu0 0
    %462 = vmatprep.subr.bf16.mxu0 0
    %463 = vmatpush1.bf16.msra.mxu0 0
    %464 = vmatprep.mubr.bf16.mxu0 0
    %465 = vmatmul.mubr.bf16.gmra.mrb[0].mxu0 %v427
    %v466 = vpop.f32.mrb[0].mxu0
    %v467 = vadd.f32 %v402, %v466
    %v468 = vpop.f32.mrb[0].mxu0
    %v469 = vpop.f32.mrb[0].mxu0
    %v470 = vadd.f32 %v406, %v469
    %v471 = vpop.f32.mrb[0].mxu0
    %472 = vmatprep.mubr.bf16.mxu0 0
    %473 = vmatmul.mubr.bf16.gmra.mrb[0].mxu0 %v430
    %v474 = vpop.f32.mrb[0].mxu0
    %v475 = vadd.f32 %v410, %v474
    %v476 = vpop.f32.mrb[0].mxu0
    %v477 = vpop.f32.mrb[0].mxu0
    %v478 = vadd.f32 %v414, %v477
    %v479 = vpop.f32.mrb[0].mxu0
    %480 = vdwg.mxu0
    %v481 = vmax.f32 %v467, 0.0
    %v482 = vmax.f32 %v470, 0.0
    %v483 = vmax.f32 %v475, 0.0
    %v484 = vmax.f32 %v478, 0.0
    %v485 = vpack.c.bf16 %v482, %v481
    %v486 = vpack.c.bf16 %v484, %v483
    %v487 = vunpack.c.l.bf16 %v485
    %v488 = vunpack.c.h.bf16 %v485
    %v489 = vunpack.c.l.bf16 %v486
    %v490 = vunpack.c.h.bf16 %v486
    %491 = vset.pattern.permute.xlu0 5
    %492 = vperm.xlu0 %491, %v23
    %v493 = vpop.permute.xlu0 %492
    %495 = vset.pattern.permute.xlu0 5
    %496 = vperm.xlu0 %495, %v24
    %v497 = vpop.permute.xlu0 %496
    %499 = vset.pattern.permute.xlu0 5
    %500 = vperm.xlu0 %499, %v25
    %v501 = vpop.permute.xlu0 %500
    %503 = vset.pattern.permute.xlu0 5
    %504 = vperm.xlu0 %503, %v26
    %v505 = vpop.permute.xlu0 %504
    %v507 = vmul.f32 %v487, %v493
    %v508 = vmul.f32 %v488, %v497
    %v509 = vmul.f32 %v489, %v501
    %v510 = vmul.f32 %v490, %v505
    %v511 = vsel %vm57, %v507, 0.0
    %v512 = vsel %vm57, %v508, 0.0
    %v513 = vadd.f32 %v511, %v512
    %v514 = vsel %vm57, %v509, 0.0
    %v515 = vadd.f32 %v513, %v514
    %v516 = vsel %vm57, %v510, 0.0
    %v517 = vadd.f32 %v515, %v516
    %v518 = vrot.slane %v517, 4
    %v519 = vadd.f32 %v517, %v518
    %v520 = vrot.slane %v519, 2
    %v521 = vadd.f32 %v519, %v520
    %v522 = vrot.slane %v521, 1
    %v523 = vadd.f32 %v521, %v522
    %vm524 = vcmask 122880
    %525 = vst.msk [vmem:[#allocation2] sm:$0x1] %vm524, %v523
    // Predicated region
    $region14: #{tpu_custom_call.1} parent=1 // pred_check
      _
    $region15: #{tpu_custom_call.1} parent=1 // pred_check_branch
      %527 = sbr.rel (0) target = $region17
    $region16: #{tpu_custom_call.1} parent=1 // pred_region
      %s529 = ssub.s32 16, 16
      %530 = vsyncadd [#allocation3], %s529
      %s532 = sshll.u32 [#allocation2], 4
      %s533 = int_to_ptr.vmem [resolvable:$true] %s532
      %535 = dma.vmem_to_hbm [thread:$0]  %s533, 16, %s3, [#allocation3]
    $region17: #{tpu_custom_call.1} parent=1 // pred_fallthru
      _
    // Predicated region
    $region18: #{tpu_custom_call.1} parent=1 // pred_check
      _
    $region19: #{tpu_custom_call.1} parent=1 // pred_check_branch
      %537 = sbr.rel (0) target = $region21
    $region20: #{tpu_custom_call.1} parent=1 // pred_region
      %538 = dma.done [#allocation3], 16
    $region21: #{tpu_custom_call.1} parent=1 // pred_fallthru
      _
    %539 = vsyncpa [#allocation3], 1

</llo_original>
